<compile_context>
chip_gen: v6e
topology: v6e:2x2x1
jax: 0.10.0
libtpu: 0.0.40
codegen_flags: <defaults>
</compile_context>

<pallas_src>
import functools

import jax
import jax.numpy as jnp
import numpy as np
from jax.experimental import pallas as pl
from jax.experimental.pallas import tpu as pltpu


POOL_K = 31                 # avg_pool2d kernel_size
POOL_R = POOL_K // 2        # padding = 15
POOL_DIV = float(POOL_K * POOL_K)
BAND_TILE = 256             # output-tile width for block-banded matmuls


def _banded_matmul_right(x, band, tile):
    """x @ band, where band[k, j] == 0 unless |k - j| <= POOL_R (f32 result).

    Static Python tiling over output columns; only the <=3 contributing K-tiles
    are multiplied.  Falls back to a dense matmul for small / non-divisible N.
    """
    n = band.shape[0]
    if n <= tile or n % tile != 0:
        return jnp.dot(x, band, preferred_element_type=jnp.float32)
    nt = n // tile
    cols = []
    for j in range(nt):
        acc = None
        for k in (j - 1, j, j + 1):                      # radius 15 << tile
            if 0 <= k < nt:
                part = jnp.dot(
                    x[:, k * tile:(k + 1) * tile],
                    band[k * tile:(k + 1) * tile, j * tile:(j + 1) * tile],
                    preferred_element_type=jnp.float32)
                acc = part if acc is None else acc + part
        cols.append(acc)
    return jnp.concatenate(cols, axis=1)


def _banded_matmul_left(band, x, tile):
    """band @ x, where band[i, k] == 0 unless |i - k| <= POOL_R (f32 result)."""
    n = band.shape[0]
    if n <= tile or n % tile != 0:
        return jnp.dot(band, x, preferred_element_type=jnp.float32)
    nt = n // tile
    rows = []
    for i in range(nt):
        acc = None
        for k in (i - 1, i, i + 1):
            if 0 <= k < nt:
                part = jnp.dot(
                    band[i * tile:(i + 1) * tile, k * tile:(k + 1) * tile],
                    x[k * tile:(k + 1) * tile, :],
                    preferred_element_type=jnp.float32)
                acc = part if acc is None else acc + part
        rows.append(acc)
    return jnp.concatenate(rows, axis=0)


def _structure_loss_kernel(pred_ref, tgt_ref, bw_ref, bh_ref, out_ref):
    """One (batch, channel) image per grid step.

    pred_ref, tgt_ref: (1, H, W) bf16 (logits / target mask)
    bw_ref: (W, W) bf16 band, entries {0, 1}            (|i-j| <= 15)
    bh_ref: (H, H) bf16 band, entries {0, 1/961}         (pool scale folded in)
    out_ref: (1, 1, 4) f32: [sum weit, sum weit*bce, sum p*t*weit, sum (p+t)*weit]
    """
    x_bf = pred_ref[0]                               # (H, W) bf16
    t_bf = tgt_ref[0]                                # (H, W) bf16
    x = x_bf.astype(jnp.float32)
    t = t_bf.astype(jnp.float32)

    # ---- weit = 1 + 5*|avg_pool2d(t, 31, s=1, p=15) - t| -------------------
    # Separable zero-padded box filter as two block-banded bf16 matmuls (MXU,
    # f32 accumulation).  The 1/961 scale lives in bh.
    th = _banded_matmul_right(t_bf, bw_ref[...], BAND_TILE)                  # f32 (H, W)
    pool = _banded_matmul_left(bh_ref[...], th.astype(jnp.bfloat16), BAND_TILE)
    weit = 1.0 + 5.0 * jnp.abs(pool - t)

    # ---- sigmoid + BCE-with-logits sharing one exp(-|x|) --------------------
    e = jnp.exp(-jnp.abs(x))
    inv_1pe = pl.reciprocal(1.0 + e, approx=True)            # EUP vrcp
    p = jnp.where(x >= 0.0, inv_1pe, e * inv_1pe)             # sigmoid(x)
    bce = jnp.maximum(x, 0.0) - x * t + jnp.log(1.0 + e)      # stable BCEWithLogits

    # ---- full (H, W) weighted reductions ------------------------------------
    tw = t * weit
    pw = p * weit
    s_w  = jnp.sum(weit,        axis=(0, 1), keepdims=True)   # (1, 1)
    s_wb = jnp.sum(weit * bce,  axis=(0, 1), keepdims=True)
    s_in = jnp.sum(pw * t,      axis=(0, 1), keepdims=True)   # inter
    s_un = jnp.sum(pw + tw,     axis=(0, 1), keepdims=True)   # union

    lane = jax.lax.broadcasted_iota(jnp.int32, (1, 1, 4), 2)
    out_ref[...] = (jnp.where(lane == 0, s_w, 0.0)
                    + jnp.where(lane == 1, s_wb, 0.0)
                    + jnp.where(lane == 2, s_in, 0.0)
                    + jnp.where(lane == 3, s_un, 0.0))


def _band_matrix(n, radius, scale, dtype):
    idx = jnp.arange(n)
    band = (jnp.abs(idx[:, None] - idx[None, :]) <= radius).astype(jnp.float32)
    return (band * scale).astype(dtype)


def _vmem_limit_bytes(H, W):
    # Pallas-managed blocks (double-buffered bf16 pred/target + bf16 bands)
    # plus an allowance for the ~8 live (H, W) f32 in-kernel temporaries.
    blocks = 2 * 2 * (2 * H * W)            # pred + target, bf16, x2 buffers
    blocks += 2 * (2 * (W * W + H * H))     # band matrices, bf16, x2 buffers
    temps = 8 * H * W * 4                   # in-kernel f32 temporaries (estimate)
    want = int(1.2 * (blocks + temps)) + (4 << 20)
    want = max(want, 32 << 20)
    try:
        phys = getattr(pltpu.get_tpu_info(), "vmem_capacity_bytes", None)
        if not phys:
            phys = 64 << 20
    except Exception:
        phys = 64 << 20                     # assume v7x (smallest VMEM)
    return int(min(want, phys - (4 << 20)))


@functools.lru_cache(maxsize=None)
def _make_call(N, H, W):
    return pl.pallas_call(
        _structure_loss_kernel,
        out_shape=jax.ShapeDtypeStruct((N, 1, 4), jnp.float32),
        grid=(N,),
        in_specs=[
            pl.BlockSpec((1, H, W), lambda i: (i, 0, 0)),   # pred  (bf16)
            pl.BlockSpec((1, H, W), lambda i: (i, 0, 0)),   # target (bf16)
            pl.BlockSpec((W, W), lambda i: (0, 0)),         # Bw (resident)
            pl.BlockSpec((H, H), lambda i: (0, 0)),         # Bh * 1/961 (resident)
        ],
        out_specs=pl.BlockSpec((1, 1, 4), lambda i: (i, 0, 0)),
        compiler_params=pltpu.CompilerParams(
            dimension_semantics=("parallel",),
            vmem_limit_bytes=_vmem_limit_bytes(H, W),
        ),
    )


def structure_loss(pred, target):
    """Pallas-TPU StructureLoss.  pred: (B,C,H,W) logits, target: (B,C,H,W) mask."""
    assert pred.shape == target.shape and pred.ndim == 4
    B, C, H, W = pred.shape
    N = B * C

    # bf16 inputs halve HBM->VMEM traffic; in-kernel math stays f32.
    pred_b = pred.astype(jnp.bfloat16).reshape(N, H, W)
    tgt_b = target.astype(jnp.bfloat16).reshape(N, H, W)

    bw = _band_matrix(W, POOL_R, 1.0, jnp.bfloat16)
    bh = _band_matrix(H, POOL_R, 1.0 / POOL_DIV, jnp.bfloat16)

    parts = _make_call(N, H, W)(pred_b, tgt_b, bw, bh)        # (N, 1, 4) f32
    parts = parts.reshape(B, C, 4)
    sw, swb = parts[..., 0], parts[..., 1]
    inter, union = parts[..., 2], parts[..., 3]
    wbce = swb / sw
    wiou = 1.0 - (inter + 1.0) / (union - inter + 1.0)
    return jnp.mean(wbce + wiou)


class StructureLossPallas:
    """Drop-in style wrapper mirroring the PyTorch nn.Module interface."""
    def __call__(self, pred, target):
        return structure_loss(pred, target)


# ---------------- pure-JAX reference (sanity check only) ----------------
def _structure_loss_reference(pred, target):
    pred = pred.astype(jnp.float32)
    target = target.astype(jnp.float32)
    box = jax.lax.reduce_window(
        target, 0.0, jax.lax.add,
        window_dimensions=(1, 1, POOL_K, POOL_K),
        window_strides=(1, 1, 1, 1),
        padding=((0, 0), (0, 0), (POOL_R, POOL_R), (POOL_R, POOL_R)))
    pool = box / POOL_DIV
    weit = 1.0 + 5.0 * jnp.abs(pool - target)
    bce = jnp.maximum(pred, 0.0) - pred * target + jnp.log1p(jnp.exp(-jnp.abs(pred)))
    wbce = (weit * bce).sum(axis=(2, 3)) / weit.sum(axis=(2, 3))
    p = jax.nn.sigmoid(pred)
    inter = (p * target * weit).sum(axis=(2, 3))
    union = ((p + target) * weit).sum(axis=(2, 3))
    wiou = 1.0 - (inter + 1.0) / (union - inter + 1.0)
    return jnp.mean(wbce + wiou)


if __name__ == "__main__":
    key = jax.random.PRNGKey(0)
    kp, kt = jax.random.split(key)
    B, C, H, W = 2, 4, 16, 16
    pred = jax.random.normal(kp, (B, C, H, W), dtype=jnp.float32)      # logits
    target = jax.random.uniform(kt, (B, C, H, W), dtype=jnp.float32)   # soft mask in [0, 1]

    loss = jax.jit(structure_loss)(pred, target)
    loss = jax.block_until_ready(loss)

    ref = jax.block_until_ready(_structure_loss_reference(pred, target))
    np.testing.assert_allclose(np.asarray(loss), np.asarray(ref), rtol=2e-2, atol=2e-2)

    print("KERNEL_OK")
</pallas_src>

<mosaic_0001>
module attributes {stable_mosaic.version = 11 : i64} {
  func.func @_structure_loss_kernel(%arg0: i32, %arg1: memref<1x16x16xbf16, #tpu.memory_space<vmem>>, %arg2: memref<1x16x16xbf16, #tpu.memory_space<vmem>>, %arg3: memref<16x16xbf16, #tpu.memory_space<vmem>>, %arg4: memref<16x16xbf16, #tpu.memory_space<vmem>>, %arg5: memref<1x1x4xf32, #tpu.memory_space<vmem>>) attributes {dimension_semantics = [#tpu.dimension_semantics<parallel>], iteration_bounds = array<i64: 8>, scalar_prefetch = 0 : i64, scratch_operands = 0 : i64, tpu.core_type = #tpu.core_type<tc>, window_params = [{transform_indices = @transform_0, window_bounds = array<i64: 1, 16, 16>}, {transform_indices = @transform_1, window_bounds = array<i64: 1, 16, 16>}, {pipeline_mode = #tpu.pipeline_mode<synchronous>, transform_indices = @transform_2, window_bounds = array<i64: 16, 16>}, {pipeline_mode = #tpu.pipeline_mode<synchronous>, transform_indices = @transform_3, window_bounds = array<i64: 16, 16>}, {transform_indices = @transform_4, window_bounds = array<i64: 1, 1, 4>}]} {
    %c0 = arith.constant 0 : index
    %c0_0 = arith.constant 0 : index
    %c0_1 = arith.constant 0 : index
    %0 = vector.load %arg1[%c0, %c0_0, %c0_1] : memref<1x16x16xbf16, #tpu.memory_space<vmem>>, vector<1x16x16xbf16>
    %1 = vector.shape_cast %0 : vector<1x16x16xbf16> to vector<16x16xbf16>
    %c0_2 = arith.constant 0 : index
    %c0_3 = arith.constant 0 : index
    %c0_4 = arith.constant 0 : index
    %2 = vector.load %arg2[%c0_2, %c0_3, %c0_4] : memref<1x16x16xbf16, #tpu.memory_space<vmem>>, vector<1x16x16xbf16>
    %3 = vector.shape_cast %2 : vector<1x16x16xbf16> to vector<16x16xbf16>
    %4 = arith.extf %1 : vector<16x16xbf16> to vector<16x16xf32>
    %5 = arith.extf %3 : vector<16x16xbf16> to vector<16x16xf32>
    %c0_5 = arith.constant 0 : index
    %c0_6 = arith.constant 0 : index
    %6 = vector.load %arg3[%c0_5, %c0_6] : memref<16x16xbf16, #tpu.memory_space<vmem>>, vector<16x16xbf16>
    %cst = arith.constant dense<0.000000e+00> : vector<16x16xf32>
    %7 = tpu.matmul %3, %6, %cst {dimension_numbers = #tpu.dot_dimension_numbers<[1], [0], [0], [1], [0, 0, 1, 1], [], []>} : vector<16x16xbf16>, vector<16x16xbf16>, vector<16x16xf32> -> vector<16x16xf32>
    %c0_7 = arith.constant 0 : index
    %c0_8 = arith.constant 0 : index
    %8 = vector.load %arg4[%c0_7, %c0_8] : memref<16x16xbf16, #tpu.memory_space<vmem>>, vector<16x16xbf16>
    %9 = arith.truncf %7 : vector<16x16xf32> to vector<16x16xbf16>
    %cst_9 = arith.constant dense<0.000000e+00> : vector<16x16xf32>
    %10 = tpu.matmul %8, %9, %cst_9 {dimension_numbers = #tpu.dot_dimension_numbers<[1], [0], [0], [1], [0, 0, 1, 1], [], []>} : vector<16x16xbf16>, vector<16x16xbf16>, vector<16x16xf32> -> vector<16x16xf32>
    %11 = arith.subf %10, %5 : vector<16x16xf32>
    %12 = math.absf %11 : vector<16x16xf32>
    %cst_10 = arith.constant 5.000000e+00 : f32
    %13 = vector.broadcast %cst_10 : f32 to vector<16x16xf32>
    %14 = arith.mulf %13, %12 : vector<16x16xf32>
    %cst_11 = arith.constant 1.000000e+00 : f32
    %15 = vector.broadcast %cst_11 : f32 to vector<16x16xf32>
    %16 = arith.addf %15, %14 : vector<16x16xf32>
    %17 = math.absf %4 : vector<16x16xf32>
    %cst_12 = arith.constant 0.000000e+00 : f32
    %18 = vector.broadcast %cst_12 : f32 to vector<16x16xf32>
    %19 = arith.subf %18, %17 : vector<16x16xf32>
    %20 = math.exp %19 : vector<16x16xf32>
    %cst_13 = arith.constant 1.000000e+00 : f32
    %21 = vector.broadcast %cst_13 : f32 to vector<16x16xf32>
    %22 = arith.addf %21, %20 : vector<16x16xf32>
    %23 = tpu.reciprocal %22 {approx = true} : vector<16x16xf32> -> vector<16x16xf32>
    %cst_14 = arith.constant 0.000000e+00 : f32
    %24 = vector.broadcast %cst_14 : f32 to vector<16x16xf32>
    %25 = arith.cmpf oge, %4, %24 : vector<16x16xf32>
    %26 = arith.mulf %20, %23 : vector<16x16xf32>
    %27 = arith.select %25, %23, %26 : vector<16x16xi1>, vector<16x16xf32>
    %cst_15 = arith.constant 0.000000e+00 : f32
    %28 = vector.broadcast %cst_15 : f32 to vector<16x16xf32>
    %29 = arith.maximumf %4, %28 : vector<16x16xf32>
    %30 = arith.mulf %4, %5 : vector<16x16xf32>
    %31 = arith.subf %29, %30 : vector<16x16xf32>
    %cst_16 = arith.constant 1.000000e+00 : f32
    %32 = vector.broadcast %cst_16 : f32 to vector<16x16xf32>
    %33 = arith.addf %32, %20 : vector<16x16xf32>
    %34 = math.log %33 : vector<16x16xf32>
    %35 = arith.addf %31, %34 : vector<16x16xf32>
    %36 = arith.mulf %5, %16 : vector<16x16xf32>
    %37 = arith.mulf %27, %16 : vector<16x16xf32>
    %38 = vector.shape_cast %16 : vector<16x16xf32> to vector<1x16x16xf32>
    %cst_17 = arith.constant dense<0.000000e+00> : vector<1xf32>
    %39 = vector.multi_reduction <add>, %38, %cst_17 [1, 2] : vector<1x16x16xf32> to vector<1xf32>
    %40 = vector.shape_cast %39 : vector<1xf32> to vector<1x1x1xf32>
    %41 = vector.extract %40[0, 0, 0] : f32 from vector<1x1x1xf32>
    %42 = vector.broadcast %41 : f32 to vector<1x1xf32>
    %43 = arith.mulf %16, %35 : vector<16x16xf32>
    %44 = vector.shape_cast %43 : vector<16x16xf32> to vector<1x16x16xf32>
    %cst_18 = arith.constant dense<0.000000e+00> : vector<1xf32>
    %45 = vector.multi_reduction <add>, %44, %cst_18 [1, 2] : vector<1x16x16xf32> to vector<1xf32>
    %46 = vector.shape_cast %45 : vector<1xf32> to vector<1x1x1xf32>
    %47 = vector.extract %46[0, 0, 0] : f32 from vector<1x1x1xf32>
    %48 = vector.broadcast %47 : f32 to vector<1x1xf32>
    %49 = arith.mulf %37, %5 : vector<16x16xf32>
    %50 = vector.shape_cast %49 : vector<16x16xf32> to vector<1x16x16xf32>
    %cst_19 = arith.constant dense<0.000000e+00> : vector<1xf32>
    %51 = vector.multi_reduction <add>, %50, %cst_19 [1, 2] : vector<1x16x16xf32> to vector<1xf32>
    %52 = vector.shape_cast %51 : vector<1xf32> to vector<1x1x1xf32>
    %53 = vector.extract %52[0, 0, 0] : f32 from vector<1x1x1xf32>
    %54 = vector.broadcast %53 : f32 to vector<1x1xf32>
    %55 = arith.addf %37, %36 : vector<16x16xf32>
    %56 = vector.shape_cast %55 : vector<16x16xf32> to vector<1x16x16xf32>
    %cst_20 = arith.constant dense<0.000000e+00> : vector<1xf32>
    %57 = vector.multi_reduction <add>, %56, %cst_20 [1, 2] : vector<1x16x16xf32> to vector<1xf32>
    %58 = vector.shape_cast %57 : vector<1xf32> to vector<1x1x1xf32>
    %59 = vector.extract %58[0, 0, 0] : f32 from vector<1x1x1xf32>
    %60 = vector.broadcast %59 : f32 to vector<1x1xf32>
    %61 = tpu.iota {dimensions = array<i32: 2>} : vector<1x1x4xi32>
    %c0_i32 = arith.constant 0 : i32
    %62 = vector.broadcast %c0_i32 : i32 to vector<1x1x4xi32>
    %63 = arith.cmpi eq, %61, %62 : vector<1x1x4xi32>
    %cst_21 = arith.constant 0.000000e+00 : f32
    %64 = vector.shape_cast %42 : vector<1x1xf32> to vector<1x1x1xf32>
    %65 = vector.broadcast %64 : vector<1x1x1xf32> to vector<1x1x4xf32>
    %66 = vector.broadcast %cst_21 : f32 to vector<1x1x4xf32>
    %67 = arith.select %63, %65, %66 : vector<1x1x4xi1>, vector<1x1x4xf32>
    %c1_i32 = arith.constant 1 : i32
    %68 = vector.broadcast %c1_i32 : i32 to vector<1x1x4xi32>
    %69 = arith.cmpi eq, %61, %68 : vector<1x1x4xi32>
    %cst_22 = arith.constant 0.000000e+00 : f32
    %70 = vector.shape_cast %48 : vector<1x1xf32> to vector<1x1x1xf32>
    %71 = vector.broadcast %70 : vector<1x1x1xf32> to vector<1x1x4xf32>
    %72 = vector.broadcast %cst_22 : f32 to vector<1x1x4xf32>
    %73 = arith.select %69, %71, %72 : vector<1x1x4xi1>, vector<1x1x4xf32>
    %74 = arith.addf %67, %73 : vector<1x1x4xf32>
    %c2_i32 = arith.constant 2 : i32
    %75 = vector.broadcast %c2_i32 : i32 to vector<1x1x4xi32>
    %76 = arith.cmpi eq, %61, %75 : vector<1x1x4xi32>
    %cst_23 = arith.constant 0.000000e+00 : f32
    %77 = vector.shape_cast %54 : vector<1x1xf32> to vector<1x1x1xf32>
    %78 = vector.broadcast %77 : vector<1x1x1xf32> to vector<1x1x4xf32>
    %79 = vector.broadcast %cst_23 : f32 to vector<1x1x4xf32>
    %80 = arith.select %76, %78, %79 : vector<1x1x4xi1>, vector<1x1x4xf32>
    %81 = arith.addf %74, %80 : vector<1x1x4xf32>
    %c3_i32 = arith.constant 3 : i32
    %82 = vector.broadcast %c3_i32 : i32 to vector<1x1x4xi32>
    %83 = arith.cmpi eq, %61, %82 : vector<1x1x4xi32>
    %cst_24 = arith.constant 0.000000e+00 : f32
    %84 = vector.shape_cast %60 : vector<1x1xf32> to vector<1x1x1xf32>
    %85 = vector.broadcast %84 : vector<1x1x1xf32> to vector<1x1x4xf32>
    %86 = vector.broadcast %cst_24 : f32 to vector<1x1x4xf32>
    %87 = arith.select %83, %85, %86 : vector<1x1x4xi1>, vector<1x1x4xf32>
    %88 = arith.addf %81, %87 : vector<1x1x4xf32>
    %c0_25 = arith.constant 0 : index
    %c0_26 = arith.constant 0 : index
    %c0_27 = arith.constant 0 : index
    %89 = vector.load %arg5[%c0_25, %c0_26, %c0_27] : memref<1x1x4xf32, #tpu.memory_space<vmem>>, vector<1x1x4xf32>
    tpu.vector_store %arg5[%c0_25, %c0_26, %c0_27], %88 {strides = array<i32>} : memref<1x1x4xf32, #tpu.memory_space<vmem>>, vector<1x1x4xf32>,
    return
  }
  func.func @transform_0(%arg0: i32) -> (i32, i32, i32) {
    %c0_i32 = arith.constant 0 : i32
    %c0_i32_0 = arith.constant 0 : i32
    %c0_i32_1 = arith.constant 0 : i32
    return %arg0, %c0_i32, %c0_i32_0 : i32, i32, i32
  }
  func.func @transform_1(%arg0: i32) -> (i32, i32, i32) {
    %c0_i32 = arith.constant 0 : i32
    %c0_i32_0 = arith.constant 0 : i32
    %c0_i32_1 = arith.constant 0 : i32
    return %arg0, %c0_i32, %c0_i32_0 : i32, i32, i32
  }
  func.func @transform_2(%arg0: i32) -> (i32, i32) {
    %c0_i32 = arith.constant 0 : i32
    %c0_i32_0 = arith.constant 0 : i32
    %c0_i32_1 = arith.constant 0 : i32
    return %c0_i32, %c0_i32_0 : i32, i32
  }
  func.func @transform_3(%arg0: i32) -> (i32, i32) {
    %c0_i32 = arith.constant 0 : i32
    %c0_i32_0 = arith.constant 0 : i32
    %c0_i32_1 = arith.constant 0 : i32
    return %c0_i32, %c0_i32_0 : i32, i32
  }
  func.func @transform_4(%arg0: i32) -> (i32, i32, i32) {
    %c0_i32 = arith.constant 0 : i32
    %c0_i32_0 = arith.constant 0 : i32
    %c0_i32_1 = arith.constant 0 : i32
    return %arg0, %c0_i32, %c0_i32_0 : i32, i32, i32
  }
}

</mosaic_0001>

<llo_original>
// kernel: structure_loss.1
$region0: #{structure_loss.1}
  #allocation0 [shape = 'u32[]', space=smem, size = 0x4, offset = 0x4, fixed_abs, tag = 'smem constant byte address 0x4 - core index']
  #allocation1 [shape = 'u32[144,128]{1,0:T(1,128)}', space=vmem, size = 0x12000, scoped, tag = 'internal scratch']
  %s0 = inlined_call_operand.vmem [shape: bf16[8,16,16], index: 0, kind: input, shape index: {}]
  %s1 = inlined_call_operand.vmem [shape: bf16[8,16,16], index: 1, kind: input, shape index: {}]
  %s2 = inlined_call_operand.vmem [shape: bf16[16,16], index: 2, kind: input, shape index: {}]
  %s3 = inlined_call_operand.vmem [shape: bf16[16,16], index: 3, kind: input, shape index: {}]
  %s4 = inlined_call_operand.vmem [shape: f32[8,1,4], index: 4, kind: output, shape index: {}]
  %s5 = sld [smem:[#allocation0]]
  $region49: #{structure_loss.1} parent=0
    _
  %s7 = ssub.s32 1, %s5
  %s8 = scalar_select 0, %s7, %s5
  loop: start=0, step=1, limit=10
  $region2: #{structure_loss.1} parent=0 // loop_pre_header
    _
  $region3: #{structure_loss.1} parent=0 // loop_header
    %s10 = sphi 0, %s14
    %p11 = scmp.ge.s32.totalorder %s10, 10
    %s20 = sphi 0, %s22
    %s23 = sphi 0, %s20
    %s24 = sphi 0, %s23
    %s40 = sphi 0, %s24
    %s46 = sphi 0, %s48
    %s49 = sphi 0, %s46
    %s50 = sphi 0, %s49
    %s66 = sphi 0, %s50
    %s70 = sphi 0, %s70
    %s72 = sphi 0, %s70
    %s73 = sphi 0, %s72
    %s87 = sphi 0, %s73
    %s91 = sphi 0, %s91
    %s93 = sphi 0, %s91
    %s94 = sphi 0, %s93
    %s108 = sphi 0, %s94
    %s114 = sphi 0, %s116
    %s117 = sphi 0, %s114
    %s118 = sphi 0, %s117
    %s134 = sphi 0, %s118
  $region4: #{structure_loss.1} parent=0 // loop_header_branch
    %13 = sbr.rel (%p11) target = $region8
  $region5: #{structure_loss.1} parent=0 // loop_body
    %s15 = ssub.s32 %s10, 1
    %s16 = ssub.s32 %s10, 2
    %s17 = sadd.s32 %s10, 1
    %s18 = ssub.s32 %s10, %s17
    %p19 = scmp.eq.s32.totalorder %s18, 0
    %s21 = sadd.s32 %s20, 1
    %s22 = scalar_select %p19, %s20, %s21
    %p25 = pneg %p19
    %p26 = scmp.eq.s32.totalorder %s10, 7
    %p27 = por %p25, %p26
    %p28 = scmp.ne.s32.totalorder %s20, %s23
    %p29 = scmp.eq.s32.totalorder %s10, 0
    %p30 = por %p28, %p29
    %p31 = scmp.ne.s32.totalorder %s20, %s23
    %p32 = scmp.eq.s32.totalorder %s15, 7
    %p33 = por %p31, %p32
    %p34 = scmp.ne.s32.totalorder %s23, %s24
    %p35 = scmp.eq.s32.totalorder %s15, 0
    %p36 = por %p34, %p35
    %p37 = scmp.ne.s32.totalorder %s23, %s24
    %p38 = scmp.eq.s32.totalorder %s16, 7
    %p39 = por %p37, %p38
    %p41 = scmp.ne.s32.totalorder %s24, %s40
    %p42 = scmp.eq.s32.totalorder %s16, 0
    %p43 = por %p41, %p42
    %s44 = ssub.s32 %s10, %s17
    %p45 = scmp.eq.s32.totalorder %s44, 0
    %s47 = sadd.s32 %s46, 1
    %s48 = scalar_select %p45, %s46, %s47
    %p51 = pneg %p45
    %p52 = scmp.eq.s32.totalorder %s10, 7
    %p53 = por %p51, %p52
    %p54 = scmp.ne.s32.totalorder %s46, %s49
    %p55 = scmp.eq.s32.totalorder %s10, 0
    %p56 = por %p54, %p55
    %p57 = scmp.ne.s32.totalorder %s46, %s49
    %p58 = scmp.eq.s32.totalorder %s15, 7
    %p59 = por %p57, %p58
    %p60 = scmp.ne.s32.totalorder %s49, %s50
    %p61 = scmp.eq.s32.totalorder %s15, 0
    %p62 = por %p60, %p61
    %p63 = scmp.ne.s32.totalorder %s49, %s50
    %p64 = scmp.eq.s32.totalorder %s16, 7
    %p65 = por %p63, %p64
    %p67 = scmp.ne.s32.totalorder %s50, %s66
    %p68 = scmp.eq.s32.totalorder %s16, 0
    %p69 = por %p67, %p68
    %s71 = sadd.s32 %s70, 1
    %p74 = scmp.eq.s32.totalorder %s10, 7
    %p75 = scmp.ne.s32.totalorder %s70, %s72
    %p76 = scmp.eq.s32.totalorder %s10, 0
    %p77 = por %p75, %p76
    %p78 = scmp.ne.s32.totalorder %s70, %s72
    %p79 = scmp.eq.s32.totalorder %s15, 7
    %p80 = por %p78, %p79
    %p81 = scmp.ne.s32.totalorder %s72, %s73
    %p82 = scmp.eq.s32.totalorder %s15, 0
    %p83 = por %p81, %p82
    %p84 = scmp.ne.s32.totalorder %s72, %s73
    %p85 = scmp.eq.s32.totalorder %s16, 7
    %p86 = por %p84, %p85
    %p88 = scmp.ne.s32.totalorder %s73, %s87
    %p89 = scmp.eq.s32.totalorder %s16, 0
    %p90 = por %p88, %p89
    %s92 = sadd.s32 %s91, 1
    %p95 = scmp.eq.s32.totalorder %s10, 7
    %p96 = scmp.ne.s32.totalorder %s91, %s93
    %p97 = scmp.eq.s32.totalorder %s10, 0
    %p98 = por %p96, %p97
    %p99 = scmp.ne.s32.totalorder %s91, %s93
    %p100 = scmp.eq.s32.totalorder %s15, 7
    %p101 = por %p99, %p100
    %p102 = scmp.ne.s32.totalorder %s93, %s94
    %p103 = scmp.eq.s32.totalorder %s15, 0
    %p104 = por %p102, %p103
    %p105 = scmp.ne.s32.totalorder %s93, %s94
    %p106 = scmp.eq.s32.totalorder %s16, 7
    %p107 = por %p105, %p106
    %p109 = scmp.ne.s32.totalorder %s94, %s108
    %p110 = scmp.eq.s32.totalorder %s16, 0
    %p111 = por %p109, %p110
    %s112 = ssub.s32 %s10, %s17
    %p113 = scmp.eq.s32.totalorder %s112, 0
    %s115 = sadd.s32 %s114, 1
    %s116 = scalar_select %p113, %s114, %s115
    %p119 = pneg %p113
    %p120 = scmp.eq.s32.totalorder %s10, 7
    %p121 = por %p119, %p120
    %p122 = scmp.ne.s32.totalorder %s114, %s117
    %p123 = scmp.eq.s32.totalorder %s10, 0
    %p124 = por %p122, %p123
    %p125 = scmp.ne.s32.totalorder %s114, %s117
    %p126 = scmp.eq.s32.totalorder %s15, 7
    %p127 = por %p125, %p126
    %p128 = scmp.ne.s32.totalorder %s117, %s118
    %p129 = scmp.eq.s32.totalorder %s15, 0
    %p130 = por %p128, %p129
    %p131 = scmp.ne.s32.totalorder %s117, %s118
    %p132 = scmp.eq.s32.totalorder %s16, 7
    %p133 = por %p131, %p132
    %p135 = scmp.ne.s32.totalorder %s118, %s134
    %p136 = scmp.eq.s32.totalorder %s16, 0
    %p137 = por %p135, %p136
    %p138 = scmp.le.s32.totalorder 1, %s10
    %p139 = scmp.lt.s32.totalorder %s10, 9
    %p140 = pnand %p138, %p139
    %p141 = pneg %p140
    // Predicated region
    $region9: #{structure_loss.1} parent=5 // pred_check
      _
    $region10: #{structure_loss.1} parent=5 // pred_check_branch
      %143 = sbr.rel (%p140) target = $region12
    $region11: #{structure_loss.1} parent=5 // pred_region
      %s144 = ssub.s32 %s10, 1
      // Predicated region
      $region13: #{structure_loss.1} parent=11 // pred_check
        %p145 = pneg %p83
      $region14: #{structure_loss.1} parent=11 // pred_check_branch
        %147 = sbr.rel (%p145) target = $region16
      $region15: #{structure_loss.1} parent=11 // pred_region
        _
      $region16: #{structure_loss.1} parent=11 // pred_fallthru
        _
      // Predicated region
      $region17: #{structure_loss.1} parent=11 // pred_check
        %p148 = pneg %p104
      $region18: #{structure_loss.1} parent=11 // pred_check_branch
        %150 = sbr.rel (%p148) target = $region20
      $region19: #{structure_loss.1} parent=11 // pred_region
        _
      $region20: #{structure_loss.1} parent=11 // pred_fallthru
        _
    $region12: #{structure_loss.1} parent=5 // pred_fallthru
      _
    %p151 = scmp.lt.s32.totalorder %s10, 8
    // Predicated region
    $region21: #{structure_loss.1} parent=5 // pred_check
      %p152 = pneg %p151
    $region22: #{structure_loss.1} parent=5 // pred_check_branch
      %154 = sbr.rel (%p152) target = $region24
    $region23: #{structure_loss.1} parent=5 // pred_region
      // Predicated region
      $region25: #{structure_loss.1} parent=23 // pred_check
        %p155 = pneg %p30
      $region26: #{structure_loss.1} parent=23 // pred_check_branch
        %157 = sbr.rel (%p155) target = $region28
      $region27: #{structure_loss.1} parent=23 // pred_region
        %p158 = scmp.lt.s32.totalorder %s10, 7
        %s159 = scalar_select %p158, %s10, 7
        %s160 = smul.addr %s159, 2
        %s161 = smul.addr %s160, 4
        %s162 = scalar_lea.vmem %s0, %s161
      $region28: #{structure_loss.1} parent=23 // pred_fallthru
        _
      // Predicated region
      $region29: #{structure_loss.1} parent=23 // pred_check
        %p163 = pneg %p56
      $region30: #{structure_loss.1} parent=23 // pred_check_branch
        %165 = sbr.rel (%p163) target = $region32
      $region31: #{structure_loss.1} parent=23 // pred_region
        %p166 = scmp.lt.s32.totalorder %s10, 7
        %s167 = scalar_select %p166, %s10, 7
        %s168 = smul.addr %s167, 2
        %s169 = smul.addr %s168, 4
        %s170 = scalar_lea.vmem %s1, %s169
      $region32: #{structure_loss.1} parent=23 // pred_fallthru
        _
    $region24: #{structure_loss.1} parent=5 // pred_fallthru
      _
    %p171 = scmp.le.s32.totalorder 1, %s10
    %p172 = scmp.lt.s32.totalorder %s10, 9
    %p173 = pnand %p171, %p172
    %p174 = pneg %p173
    // Predicated region
    $region33: #{structure_loss.1} parent=5 // pred_check
      _
    $region34: #{structure_loss.1} parent=5 // pred_check_branch
      %176 = sbr.rel (%p173) target = $region36
    $region35: #{structure_loss.1} parent=5 // pred_region
      %s177 = ssub.s32 %s10, 1
      %p178 = scmp.lt.s32.totalorder %s15, 7
      %s179 = scalar_select %p178, %s15, 7
      %s180 = smul.addr %s179, 2
      %s181 = smul.addr %s180, 4
      %s182 = scalar_lea.vmem %s0, %s181
      %p183 = pneg %p36
      %p184 = pneg %p33
      %p185 = scmp.lt.s32.totalorder %s15, 7
      %s186 = scalar_select %p185, %s15, 7
      %s187 = smul.addr %s186, 2
      %s188 = smul.addr %s187, 4
      %s189 = scalar_lea.vmem %s1, %s188
      %p190 = pneg %p62
      %p191 = pneg %p59
      %p192 = pneg %p83
      %p193 = pneg %p80
      %p194 = pneg %p104
      %p195 = pneg %p101
      %p196 = pneg %p130
      %p197 = pneg %p127
      %p198 = scmp.lt.s32.totalorder %s15, 7
      %s199 = scalar_select %p198, %s15, 7
      %s200 = scalar_lea.vmem %s4, %s199
      %p201 = scmp.lt.s32.totalorder %s15, 7
      %s202 = scalar_select %p201, %s15, 7
      %s203 = smul.addr %s202, 2
      %s204 = smul.addr %s203, 4
      %s205 = scalar_lea.vmem %s0, %s204
      %p206 = scmp.lt.s32.totalorder %s15, 7
      %s207 = scalar_select %p206, %s15, 7
      %s208 = smul.addr %s207, 2
      %s209 = smul.addr %s208, 4
      %s210 = scalar_lea.vmem %s1, %s209
      %p211 = scmp.lt.s32.totalorder %s15, 7
      %s212 = scalar_select %p211, %s15, 7
      %s213 = scalar_lea.vmem %s4, %s212
      %v215 = vld [vmem:[%s205] sm:$0xf]
      %v216 = vld [vmem:[%s205 + $0x4] sm:$0xf]
      %v217 = vld [vmem:[%s210] sm:$0xf]
      %v218 = vld [vmem:[%s210 + $0x4] sm:$0xf]
      %v219 = vunpack.c.l.bf16 %v215
      %v220 = vunpack.c.l.bf16 %v216
      %v221 = vunpack.c.l.bf16 %v217
      %v222 = vunpack.c.l.bf16 %v218
      %v223 = vld [vmem:[%s2] sm:$0xf]
      %v224 = vld [vmem:[%s2 + $0x4] sm:$0xf]
      %v227 = vunpack.c.l.b16 %v217
      %v228 = vunpack.c.l.b16 %v218
      %v229 = vpack.c.b16 %v228, %v227
      %v232 = vunpack.c.l.b16 %v223
      %v233 = vunpack.c.l.b16 %v224
      %v234 = vpack.c.b16 %v233, %v232
      %vm236 = vcmask 130048
      %v238 = vsel %vm236, %v229, 0
      %240 = vmatprep.subr.bf16.mxu0 0
      %241 = vmatpush1.bf16.msra.mxu0 0
      %242 = vmatprep.subr.bf16.mxu0 0
      %243 = vmatpush1.bf16.msra.mxu0 0
      %244 = vmatprep.subr.bf16.mxu0 0
      %245 = vmatpush1.bf16.msra.mxu0 0
      %246 = vmatprep.subr.bf16.mxu0 0
      %247 = vmatpush1.bf16.msra.mxu0 0
      %248 = vmatprep.subr.bf16.mxu0 0
      %249 = vmatpush1.bf16.msra.mxu0 0
      %250 = vmatprep.subr.bf16.mxu0 0
      %251 = vmatpush1.bf16.msra.mxu0 0
      %252 = vmatprep.subr.bf16.mxu0 0
      %253 = vmatpush1.bf16.msra.mxu0 0
      %254 = vmatprep.subr.bf16.mxu0 0
      %255 = vmatpush1.bf16.msra.mxu0 %v234
      %256 = vmatprep.subr.bf16.mxu0 0
      %257 = vmatpush2.bf16.msra.mxu0 0
      %258 = vmatprep.subr.bf16.mxu0 0
      %259 = vmatpush2.bf16.msra.mxu0 0
      %260 = vmatprep.subr.bf16.mxu0 0
      %261 = vmatpush2.bf16.msra.mxu0 0
      %262 = vmatprep.subr.bf16.mxu0 0
      %263 = vmatpush2.bf16.msra.mxu0 0
      %264 = vmatprep.subr.bf16.mxu0 0
      %265 = vmatpush2.bf16.msra.mxu0 0
      %266 = vmatprep.subr.bf16.mxu0 0
      %267 = vmatpush2.bf16.msra.mxu0 0
      %268 = vmatprep.subr.bf16.mxu0 0
      %269 = vmatpush2.bf16.msra.mxu0 0
      %270 = vmatprep.subr.bf16.mxu0 0
      %271 = vmatpush2.bf16.msra.mxu0 0
      %272 = vmatprep.mubr.bf16.mxu0 0
      %273 = vmatmul.mubr.bf16.gmra.mxu0 %v238
      %v274 = vpop.f32.mrf.mxu0
      %v275 = vadd.f32 0.0, %v274
      %v276 = vpop.f32.mrf.mxu0
      %v277 = vpop.f32.mrf.mxu0
      %v278 = vadd.f32 0.0, %v277
      %v279 = vpop.f32.mrf.mxu0
      %280 = vdwg.mxu0
      %v281 = vld [vmem:[%s3] sm:$0xf]
      %v282 = vld [vmem:[%s3 + $0x4] sm:$0xf]
      %v283 = vpack.c.bf16 %v278, %v275
      %v286 = vunpack.c.l.b16 %v281
      %v287 = vunpack.c.l.b16 %v282
      %v288 = vpack.c.b16 %v287, %v286
      %v290 = vsel %vm236, %v288, 0
      %292 = vmatprep.subr.bf16.mxu0 0
      %293 = vmatpush1.bf16.msra.mxu0 0
      %294 = vmatprep.subr.bf16.mxu0 0
      %295 = vmatpush1.bf16.msra.mxu0 0
      %296 = vmatprep.subr.bf16.mxu0 0
      %297 = vmatpush1.bf16.msra.mxu0 0
      %298 = vmatprep.subr.bf16.mxu0 0
      %299 = vmatpush1.bf16.msra.mxu0 0
      %300 = vmatprep.subr.bf16.mxu0 0
      %301 = vmatpush1.bf16.msra.mxu0 0
      %302 = vmatprep.subr.bf16.mxu0 0
      %303 = vmatpush1.bf16.msra.mxu0 0
      %304 = vmatprep.subr.bf16.mxu0 0
      %305 = vmatpush1.bf16.msra.mxu0 0
      %306 = vmatprep.subr.bf16.mxu0 0
      %307 = vmatpush1.bf16.msra.mxu0 %v283
      %308 = vmatprep.subr.bf16.mxu0 0
      %309 = vmatpush2.bf16.msra.mxu0 0
      %310 = vmatprep.subr.bf16.mxu0 0
      %311 = vmatpush2.bf16.msra.mxu0 0
      %312 = vmatprep.subr.bf16.mxu0 0
      %313 = vmatpush2.bf16.msra.mxu0 0
      %314 = vmatprep.subr.bf16.mxu0 0
      %315 = vmatpush2.bf16.msra.mxu0 0
      %316 = vmatprep.subr.bf16.mxu0 0
      %317 = vmatpush2.bf16.msra.mxu0 0
      %318 = vmatprep.subr.bf16.mxu0 0
      %319 = vmatpush2.bf16.msra.mxu0 0
      %320 = vmatprep.subr.bf16.mxu0 0
      %321 = vmatpush2.bf16.msra.mxu0 0
      %322 = vmatprep.subr.bf16.mxu0 0
      %323 = vmatpush2.bf16.msra.mxu0 0
      %324 = vmatprep.mubr.bf16.mxu0 0
      %325 = vmatmul.mubr.bf16.gmra.mxu0 %v290
      %v326 = vpop.f32.mrf.mxu0
      %v327 = vadd.f32 0.0, %v326
      %v328 = vpop.f32.mrf.mxu0
      %v329 = vpop.f32.mrf.mxu0
      %v330 = vadd.f32 0.0, %v329
      %v331 = vpop.f32.mrf.mxu0
      %332 = vdwg.mxu0
      %v333 = vsub.f32 %v327, %v221
      %v334 = vsub.f32 %v330, %v222
      %v335 = vand.u32 2147483647, %v333
      %v336 = vand.u32 2147483647, %v334
      %v337 = vmul.f32 %v335, 5.0
      %v338 = vmul.f32 %v336, 5.0
      %v339 = vadd.f32 %v337, 1.0
      %v340 = vadd.f32 %v338, 1.0
      %v341 = vand.u32 2147483647, %v219
      %v342 = vand.u32 2147483647, %v220
      %v343 = vsub.f32 0.0, %v341
      %v344 = vsub.f32 0.0, %v342
      %v345 = vmul.f32 %v343, 1.442695
      %v346 = vpow.pop %v345
      %v347 = vmul.f32 %v344, 1.442695
      %v348 = vpow.pop %v347
      %v349 = vadd.f32 %v346, 1.0
      %v350 = vadd.f32 %v348, 1.0
      %v351 = vrcp.pop %v349
      %v352 = vrcp.pop %v350
      %vm353 = vcmp.ge.f32.partialorder %v219, 0.0
      %vm354 = vcmp.ge.f32.partialorder %v220, 0.0
      %v355 = vmul.f32 %v346, %v351
      %v356 = vmul.f32 %v348, %v352
      %v357 = vsel %vm353, %v351, %v355
      %v358 = vsel %vm354, %v352, %v356
      %v359 = vmax.f32 %v219, 0.0
      %v360 = vmax.f32 %v220, 0.0
      %v361 = vmul.f32 %v219, %v221
      %v362 = vmul.f32 %v220, %v222
      %v363 = vsub.f32 %v359, %v361
      %v364 = vsub.f32 %v360, %v362
      %v365 = vlog2.pop %v349
      %v366 = vmul.f32 %v365, 0.6931472
      %v367 = vlog2.pop %v350
      %v368 = vmul.f32 %v367, 0.6931472
      %v369 = vadd.f32 %v363, %v366
      %v370 = vadd.f32 %v364, %v368
      %v371 = vmul.f32 %v221, %v339
      %v372 = vmul.f32 %v222, %v340
      %v373 = vmul.f32 %v357, %v339
      %v374 = vmul.f32 %v358, %v340
      %v375 = vsel %vm236, %v339, 0.0
      %v376 = vsel %vm236, %v340, 0.0
      %v377 = vadd.f32 %v375, %v376
      %378 = vadd.xlane.f32.xlu0 %v377
      %v379 = vpop.xlane.xlu0 %378
      %v380 = vrot.slane %v379, 4
      %v381 = vadd.f32 %v379, %v380
      %v382 = vrot.slane %v381, 2
      %v383 = vadd.f32 %v381, %v382
      %v384 = vrot.slane %v383, 1
      %v385 = vadd.f32 %v383, %v384
      %s386 = vtos %v385
      %v387 = vmul.f32 %v339, %v369
      %v388 = vmul.f32 %v340, %v370
      %v389 = vsel %vm236, %v387, 0.0
      %v390 = vsel %vm236, %v388, 0.0
      %v391 = vadd.f32 %v389, %v390
      %392 = vadd.xlane.f32.xlu0 %v391
      %v393 = vpop.xlane.xlu0 %392
      %v394 = vrot.slane %v393, 4
      %v395 = vadd.f32 %v393, %v394
      %v396 = vrot.slane %v395, 2
      %v397 = vadd.f32 %v395, %v396
      %v398 = vrot.slane %v397, 1
      %v399 = vadd.f32 %v397, %v398
      %s400 = vtos %v399
      %v401 = vmul.f32 %v373, %v221
      %v402 = vmul.f32 %v374, %v222
      %v403 = vsel %vm236, %v401, 0.0
      %v404 = vsel %vm236, %v402, 0.0
      %v405 = vadd.f32 %v403, %v404
      %406 = vadd.xlane.f32.xlu0 %v405
      %v407 = vpop.xlane.xlu0 %406
      %v408 = vrot.slane %v407, 4
      %v409 = vadd.f32 %v407, %v408
      %v410 = vrot.slane %v409, 2
      %v411 = vadd.f32 %v409, %v410
      %v412 = vrot.slane %v411, 1
      %v413 = vadd.f32 %v411, %v412
      %s414 = vtos %v413
      %v415 = vadd.f32 %v373, %v371
      %v416 = vadd.f32 %v374, %v372
      %v417 = vsel %vm236, %v415, 0.0
      %v418 = vsel %vm236, %v416, 0.0
      %v419 = vadd.f32 %v417, %v418
      %420 = vadd.xlane.f32.xlu0 %v419
      %v421 = vpop.xlane.xlu0 %420
      %v422 = vrot.slane %v421, 4
      %v423 = vadd.f32 %v421, %v422
      %v424 = vrot.slane %v423, 2
      %v425 = vadd.f32 %v423, %v424
      %v426 = vrot.slane %v425, 1
      %v427 = vadd.f32 %v425, %v426
      %s428 = vtos %v427
      %v429 = vlaneseq
      %v430 = vand.u32 %v429, 127
      %vm431 = vcmp.eq.s32.totalorder %v430, 0
      %v432 = vstv %s386
      %v433 = vsel %vm431, %v432, 0.0
      %vm434 = vcmp.eq.s32.totalorder %v430, 1
      %v435 = vstv %s400
      %v436 = vsel %vm434, %v435, 0.0
      %v437 = vadd.f32 %v433, %v436
      %vm438 = vcmp.eq.s32.totalorder %v430, 2
      %v439 = vstv %s414
      %v440 = vsel %vm438, %v439, 0.0
      %v441 = vadd.f32 %v437, %v440
      %vm442 = vcmp.eq.s32.totalorder %v430, 3
      %v443 = vstv %s428
      %v444 = vsel %vm442, %v443, 0.0
      %v445 = vadd.f32 %v441, %v444
      %vm446 = vcmask 24576
      %447 = vst.msk [vmem:[%s213] sm:$0x1] %vm446, %v445
      %p448 = scmp.lt.s32.totalorder %s15, 7
      %s449 = scalar_select %p448, %s15, 7
      %s450 = scalar_lea.vmem %s4, %s449
      // Predicated region
      $region37: #{structure_loss.1} parent=35 // pred_check
        %p451 = pneg %p127
      $region38: #{structure_loss.1} parent=35 // pred_check_branch
        %453 = sbr.rel (%p451) target = $region40
      $region39: #{structure_loss.1} parent=35 // pred_region
        _
      $region40: #{structure_loss.1} parent=35 // pred_fallthru
        _
    $region36: #{structure_loss.1} parent=5 // pred_fallthru
      _
    %p454 = scmp.le.s32.totalorder 2, %s10
    // Predicated region
    $region41: #{structure_loss.1} parent=5 // pred_check
      %p455 = pneg %p454
    $region42: #{structure_loss.1} parent=5 // pred_check_branch
      %457 = sbr.rel (%p455) target = $region44
    $region43: #{structure_loss.1} parent=5 // pred_region
      %s458 = ssub.s32 %s10, 2
      // Predicated region
      $region45: #{structure_loss.1} parent=43 // pred_check
        %p459 = pneg %p133
      $region46: #{structure_loss.1} parent=43 // pred_check_branch
        %461 = sbr.rel (%p459) target = $region48
      $region47: #{structure_loss.1} parent=43 // pred_region
        %p462 = scmp.lt.s32.totalorder %s16, 7
        %s463 = scalar_select %p462, %s16, 7
        %s464 = scalar_lea.vmem %s4, %s463
      $region48: #{structure_loss.1} parent=43 // pred_fallthru
        _
    $region44: #{structure_loss.1} parent=5 // pred_fallthru
      _
  $region6: #{structure_loss.1} parent=0 // loop_footer
    %s14 = sadd.s32 1, %s10
  $region7: #{structure_loss.1} parent=0 // loop_footer_branch
    %9 = sbr.rel target = $region3
  $region8: #{structure_loss.1} parent=0 // loop_exit
    _

</llo_original>
